<compile_context>
chip_gen: v5e
topology: v5e:2x2
jax: 0.10.0
libtpu: 0.0.40
codegen_flags: <defaults>
</compile_context>

<pallas_src>
import numpy as np
import jax
import jax.numpy as jnp
from jax.experimental import pallas as pl
from jax.experimental.pallas import tpu as pltpu

# Scoped-VMEM budget for every pallas_call.  Tile plans below target <= ~28 MiB
# of live (double-buffered) blocks so they fit v7x's 64 MiB physical VMEM;
# 48 MiB leaves headroom and also lifts v5e's 16 MiB scoped default.
_VMEM_LIMIT_BYTES = 48 * 1024 * 1024
# Budget for the double-buffered weight + f32 output column blocks per call.
_COL_BLOCK_BUDGET = 12 * 1024 * 1024


def _round_up(x: int, m: int) -> int:
    return ((x + m - 1) // m) * m


def _pick_col_tile(out_p, kdim, tm, w_itemsize, budget=_COL_BLOCK_BUDGET):
    """Largest lane-dense column tile that divides out_p and whose
    double-buffered weight block + f32 output block fit the budget."""
    for cand in (out_p, 1024, 512, 384, 256, 128):
        if cand > out_p or out_p % cand != 0:
            continue
        live = 2 * (kdim * cand * w_itemsize + tm * cand * 4)
        if live <= budget:
            return cand
    return 128          # out_p is always a multiple of 128


# ------------------------------- head kernel ------------------------------- #

def _head_kernel(x_ref, w_ref, b_ref, o_ref):
    # y = x @ W + b ; bf16 operands, f32 MXU accumulation, f32 bias add.
    o_ref[...] = (
        jnp.dot(x_ref[...], w_ref[...], preferred_element_type=jnp.float32)
        + b_ref[...]
    )


def head_linear(x, w, b, *, row_tile=512):
    """x: (N, nhid) compute dtype; w: (nhid, OUT_pad); b: (1, OUT_pad) f32."""
    n, k = x.shape
    out_p = w.shape[1]                       # already a multiple of 128

    # Large row tiles for W_head reuse.  No host-side pad of x: either the
    # tile covers the whole batch, or the ragged last tile is handled by the
    # grid (masked stores). row_tile is a multiple of 16 (bf16 sublanes).
    tm = n if n <= row_tile else row_tile
    tn = _pick_col_tile(out_p, k, tm, w.dtype.itemsize)

    grid = (pl.cdiv(n, tm), out_p // tn)
    flops = 2 * n * k * out_p
    w_bytes = k * out_p * w.dtype.itemsize * (1 if tn == out_p else grid[0])
    bytes_accessed = int(n * k * x.dtype.itemsize + w_bytes
                         + out_p * 4 + n * out_p * 4)

    return pl.pallas_call(
        _head_kernel,
        out_shape=jax.ShapeDtypeStruct((n, out_p), jnp.float32),
        grid_spec=pltpu.PrefetchScalarGridSpec(
            num_scalar_prefetch=0,
            grid=grid,
            in_specs=[pl.BlockSpec((tm, k), lambda i, j: (i, 0)),
                      pl.BlockSpec((k, tn), lambda i, j: (0, j)),
                      pl.BlockSpec((1, tn), lambda i, j: (0, j))],   # bias cols
            out_specs=pl.BlockSpec((tm, tn), lambda i, j: (i, j)),
        ),
        compiler_params=pltpu.CompilerParams(
            dimension_semantics=("parallel", "parallel"),
            vmem_limit_bytes=_VMEM_LIMIT_BYTES),
        cost_estimate=pl.CostEstimate(flops=flops, transcendentals=0,
                                      bytes_accessed=bytes_accessed),
    )(x, w, b)


# ------------------------------- tail kernel ------------------------------- #

def _tail_kernel(idx_ref, x_hbm, w1_hbm, w2_ref, o_ref,
                 xbuf, w1buf, h_ref, sems):
    i = pl.program_id(0)                     # row tile
    tm = xbuf.shape[0]
    cdtype = w2_ref.dtype

    @pl.when(pl.program_id(1) == 0)
    def _gather_and_project():
        # Single-buffered W1 fetch (HBM -> VMEM scratch); overlaps the gather.
        w1_cp = pltpu.make_async_copy(w1_hbm, w1buf, sems.at[0])
        w1_cp.start()

        # Row gather straight from HBM (indices via scalar prefetch / SMEM).
        # One shared DMA semaphore; the same descriptor object is used for
        # start and wait; fully unrolled (tm is a trace-time constant).
        copies = []
        for r in range(tm):
            row = idx_ref[i * tm + r]
            cp = pltpu.make_async_copy(x_hbm.at[pl.ds(row, 1), :],
                                       xbuf.at[pl.ds(r, 1), :],
                                       sems.at[1])
            cp.start()
            copies.append(cp)

        w1_cp.wait()
        for cp in copies:
            cp.wait()

        # h = x_sel @ W1 : computed ONCE per row tile, stored in bf16 scratch
        # and reused by every output-column tile (inner "arbitrary" axis).
        h_ref[...] = jnp.dot(xbuf[...].astype(cdtype), w1buf[...],
                             preferred_element_type=jnp.float32).astype(cdtype)

    o_ref[...] = jnp.dot(h_ref[...], w2_ref[...],
                         preferred_element_type=jnp.float32)


def tail_branch(x, ids, w1, w2, *, row_tile=256):
    """x: (N, nhid) f32 (gathered at 32-bit granularity, cast in-kernel);
    ids: host int32 row indices; w1: (nhid, mid) bf16; w2: (mid, OSZ_pad) bf16."""
    n, k = x.shape
    mid = w1.shape[1]
    out_p = w2.shape[1]                      # already a multiple of 128
    n_sel = int(len(ids))

    # One (or few) large row tiles per bin so W2 is streamed from HBM once;
    # rounded to 16 for bf16 sublane packing.  Padded entries gather row 0 and
    # are sliced off (wasted MXU only, never a numerics issue).
    tm = min(_round_up(max(n_sel, 1), 16), row_tile)
    n_idx = _round_up(max(n_sel, 1), tm)
    idx = np.zeros((n_idx,), np.int32)
    idx[:n_sel] = np.asarray(ids, np.int32)[:n_sel]

    tn = _pick_col_tile(out_p, mid, tm, w2.dtype.itemsize)

    grid = (n_idx // tm, out_p // tn)
    flops = 2 * n_idx * k * mid + 2 * n_idx * mid * out_p
    bytes_accessed = int(n_idx * k * x.dtype.itemsize
                         + grid[0] * k * mid * w1.dtype.itemsize
                         + grid[0] * mid * out_p * w2.dtype.itemsize
                         + n_idx * out_p * 4)

    out = pl.pallas_call(
        _tail_kernel,
        out_shape=jax.ShapeDtypeStruct((n_idx, out_p), jnp.float32),
        grid_spec=pltpu.PrefetchScalarGridSpec(
            num_scalar_prefetch=1,                            # row indices
            grid=grid,
            in_specs=[pl.BlockSpec(memory_space=pl.ANY),      # x stays in HBM
                      pl.BlockSpec(memory_space=pl.ANY),      # W1 stays in HBM
                      pl.BlockSpec((mid, tn), lambda i, j, idx_r: (0, j))],
            out_specs=pl.BlockSpec((tm, tn), lambda i, j, idx_r: (i, j)),
            scratch_shapes=[pltpu.VMEM((tm, k), x.dtype),     # gathered rows
                            pltpu.VMEM((k, mid), w1.dtype),   # single-buffered W1
                            pltpu.VMEM((tm, mid), w2.dtype),  # h (bf16)
                            pltpu.SemaphoreType.DMA((2,))],   # [w1, gather]
        ),
        compiler_params=pltpu.CompilerParams(
            dimension_semantics=("parallel", "arbitrary"),
            vmem_limit_bytes=_VMEM_LIMIT_BYTES),
        cost_estimate=pl.CostEstimate(flops=flops, transcendentals=0,
                                      bytes_accessed=bytes_accessed),
    )(jnp.asarray(idx), x, w1, w2)
    return out[:n_sel]


# ---------------------------- module-like wrapper --------------------------- #

class AdaptiveSoftmaxPallas:
    """Pallas/TPU re-implementation of the PyTorch AdaptiveSoftmax forward pass."""

    def __init__(self, nhid, cutoff, key, compute_dtype=jnp.bfloat16):
        self.nhid = nhid
        self.cutoff = list(cutoff)
        self.output_size = cutoff[0] + len(cutoff) - 1
        self.compute_dtype = compute_dtype

        def xavier(k, fan_in, fan_out, pad_to):
            std = np.sqrt(2.0 / (fan_in + fan_out))
            w = jax.random.normal(k, (fan_in, fan_out), jnp.float32) * std
            if pad_to > fan_out:                       # lane-pad with zeros
                w = jnp.pad(w, ((0, 0), (0, pad_to - fan_out)))
            return w.astype(compute_dtype)

        keys = jax.random.split(key, 2 + 2 * (len(cutoff) - 1))

        # head: Linear(nhid, output_size) with bias; columns padded to 128 lanes.
        self.out_pad = _round_up(self.output_size, 128)
        self.w_head = xavier(keys[0], nhid, self.output_size, self.out_pad)
        b = jax.random.normal(keys[1], (1, self.output_size), jnp.float32) * 0.01
        self.b_head = jnp.pad(b, ((0, 0), (0, self.out_pad - self.output_size)))

        # tails: Linear(nhid, nhid//4**i, False) -> Linear(., cutoff[i+1]-cutoff[i], False)
        self.tail_w1, self.tail_w2 = [], []
        for i in range(len(cutoff) - 1):
            mid = nhid // (4 ** i)
            osz = cutoff[i + 1] - cutoff[i]
            osz_pad = _round_up(osz, 128)
            self.tail_w1.append(xavier(keys[2 + 2 * i], nhid, mid, mid))
            self.tail_w2.append(xavier(keys[3 + 2 * i], mid, osz, osz_pad))

        self.id = []

    def set_target(self, target):
        # host-side, concrete targets; mirrors the PyTorch set_target glue
        target = np.asarray(target)
        self.id = []
        for i in range(len(self.cutoff) - 1):
            mask = (target >= self.cutoff[i]) & (target < self.cutoff[i + 1])
            if mask.sum() > 0:
                self.id.append(np.nonzero(mask)[0].astype(np.int32))
            else:
                print("set_target no data in vocabulary bin")
                self.id.append(None)

    def forward(self, x):
        x_c = x.astype(self.compute_dtype)       # bf16 at the boundary
        x_rows = x if x.dtype == jnp.float32 else x.astype(jnp.float32)
        head = head_linear(x_c, self.w_head, self.b_head)[:, :self.output_size]
        output = [head]
        # TODO(synk): fuse head + tail branches into one grouped-matmul
        # pallas_call; branch shapes differ (mid = nhid // 4**i) so they stay
        # separate calls here.
        for i, ids in enumerate(self.id):
            if ids is None:
                output.append(None)
                continue
            osz = self.cutoff[i + 1] - self.cutoff[i]
            t = tail_branch(x_rows, ids, self.tail_w1[i], self.tail_w2[i])
            output.append(t[:, :osz])
        return output


# ----------------------------------- main ----------------------------------- #

if __name__ == "__main__":
    nhid = 32
    cutoff = [8, 16, 24]        # head covers vocab [0,8) plus 2 cluster tokens
    batch = 8

    key = jax.random.PRNGKey(0)
    k_param, k_x, k_t = jax.random.split(key, 3)

    cdtype = jnp.bfloat16
    model = AdaptiveSoftmaxPallas(nhid, cutoff, k_param, compute_dtype=cdtype)

    x = jax.random.normal(k_x, (batch, nhid), jnp.float32)
    target = np.asarray(jax.random.randint(k_t, (batch,), 0, cutoff[-1]))

    model.set_target(target)
    out = model.forward(x)

    for o in out:
        if o is not None:
            jax.block_until_ready(o)

    # ---------- reference in plain JAX (same math, same casts) ----------
    x_c = x.astype(cdtype)
    ref_head = (jnp.dot(x_c, model.w_head, preferred_element_type=jnp.float32)
                + model.b_head)[:, :model.output_size]
    ref = [ref_head]
    for i, ids in enumerate(model.id):
        if ids is None:
            ref.append(None)
            continue
        osz = model.cutoff[i + 1] - model.cutoff[i]
        xs = x[np.asarray(ids)].astype(cdtype)
        h = jnp.dot(xs, model.tail_w1[i],
                    preferred_element_type=jnp.float32).astype(cdtype)
        t = jnp.dot(h, model.tail_w2[i], preferred_element_type=jnp.float32)
        ref.append(t[:, :osz])

    for o, r in zip(out, ref):
        if o is None:
            assert r is None
        else:
            np.testing.assert_allclose(np.asarray(o), np.asarray(r),
                                       rtol=2e-2, atol=2e-2)

    print("KERNEL_OK")
</pallas_src>

<mosaic_0001>
module attributes {stable_mosaic.version = 11 : i64} {
  func.func @_head_kernel(%arg0: i32, %arg1: i32, %arg2: memref<8x32xbf16, #tpu.memory_space<vmem>>, %arg3: memref<32x128xbf16, #tpu.memory_space<vmem>>, %arg4: memref<1x128xf32, #tpu.memory_space<vmem>>, %arg5: memref<8x128xf32, #tpu.memory_space<vmem>>) attributes {dimension_semantics = [#tpu.dimension_semantics<parallel>, #tpu.dimension_semantics<parallel>], iteration_bounds = array<i64: 1, 1>, scalar_prefetch = 0 : i64, scratch_operands = 0 : i64, tpu.core_type = #tpu.core_type<tc>, window_params = [{transform_indices = @transform_0, window_bounds = array<i64: 8, 32>}, {transform_indices = @transform_1, window_bounds = array<i64: 32, 128>}, {transform_indices = @transform_2, window_bounds = array<i64: 1, 128>}, {transform_indices = @transform_3, window_bounds = array<i64: 8, 128>}]} {
    %c0 = arith.constant 0 : index
    %c0_0 = arith.constant 0 : index
    %0 = vector.load %arg2[%c0, %c0_0] : memref<8x32xbf16, #tpu.memory_space<vmem>>, vector<8x32xbf16>
    %c0_1 = arith.constant 0 : index
    %c0_2 = arith.constant 0 : index
    %1 = vector.load %arg3[%c0_1, %c0_2] : memref<32x128xbf16, #tpu.memory_space<vmem>>, vector<32x128xbf16>
    %cst = arith.constant dense<0.000000e+00> : vector<8x128xf32>
    %2 = tpu.matmul %0, %1, %cst {dimension_numbers = #tpu.dot_dimension_numbers<[1], [0], [0], [1], [0, 0, 1, 1], [], []>} : vector<8x32xbf16>, vector<32x128xbf16>, vector<8x128xf32> -> vector<8x128xf32>
    %c0_3 = arith.constant 0 : index
    %c0_4 = arith.constant 0 : index
    %3 = vector.load %arg4[%c0_3, %c0_4] : memref<1x128xf32, #tpu.memory_space<vmem>>, vector<1x128xf32>
    %4 = vector.broadcast %3 : vector<1x128xf32> to vector<8x128xf32>
    %5 = arith.addf %2, %4 : vector<8x128xf32>
    %c0_5 = arith.constant 0 : index
    %c0_6 = arith.constant 0 : index
    %6 = vector.load %arg5[%c0_5, %c0_6] : memref<8x128xf32, #tpu.memory_space<vmem>>, vector<8x128xf32>
    tpu.vector_store %arg5[%c0_5, %c0_6], %5 {strides = array<i32>} : memref<8x128xf32, #tpu.memory_space<vmem>>, vector<8x128xf32>,
    return
  }
  func.func @transform_0(%arg0: i32, %arg1: i32) -> (i32, i32) {
    %c0_i32 = arith.constant 0 : i32
    %c0_i32_0 = arith.constant 0 : i32
    return %arg0, %c0_i32 : i32, i32
  }
  func.func @transform_1(%arg0: i32, %arg1: i32) -> (i32, i32) {
    %c0_i32 = arith.constant 0 : i32
    %c0_i32_0 = arith.constant 0 : i32
    return %c0_i32, %arg1 : i32, i32
  }
  func.func @transform_2(%arg0: i32, %arg1: i32) -> (i32, i32) {
    %c0_i32 = arith.constant 0 : i32
    %c0_i32_0 = arith.constant 0 : i32
    return %c0_i32, %arg1 : i32, i32
  }
  func.func @transform_3(%arg0: i32, %arg1: i32) -> (i32, i32) {
    %c0_i32 = arith.constant 0 : i32
    return %arg0, %arg1 : i32, i32
  }
}

</mosaic_0001>

<llo_original>
// kernel: tpu_custom_call.1
$region0: #{tpu_custom_call.1}
  #allocation0 [shape = 'u32[]', space=smem, size = 0x4, offset = 0x4, fixed_abs, tag = 'smem constant byte address 0x4 - core index']
  #allocation1 [shape = 'u32[72,128]{1,0:T(1,128)}', space=vmem, size = 0x9000, scoped, tag = 'internal scratch']
  %s0 = inlined_call_operand.hbm [shape: bf16[8,32], index: 0, kind: input, shape index: {}]
  %s1 = inlined_call_operand.hbm [shape: bf16[32,128], index: 1, kind: input, shape index: {}]
  %s2 = inlined_call_operand.vmem [shape: f32[1,128], index: 2, kind: input, shape index: {}]
  %s3 = inlined_call_operand.hbm [shape: f32[8,128], index: 3, kind: output, shape index: {}]
  %s4 = sld [smem:[#allocation0]]
  $region30: #{tpu_custom_call.1} parent=0
    _
  %s6 = ssub.s32 1, %s4
  %s7 = scalar_select 0, %s6, %s4
  $region1: #{tpu_custom_call.1} parent=0
    #allocation2 [shape = 'u8[2048]{0}', space=vmem, size = 0x800, scoped, tag = 'input window, operand 0, single buffered']
    #allocation3 [shape = 's32[1]{0}', space=sflag, size = 0x4, scoped, tag = 'scoped memory for tpu_custom_call.1']
    #allocation4 [shape = 's32[1]{0}', space=sflag, size = 0x4, scoped, tag = 'scoped memory for tpu_custom_call.1']
    #allocation5 [shape = 'u8[8192]{0}', space=vmem, size = 0x2000, scoped, tag = 'input window, operand 1, single buffered']
    #allocation6 [shape = 's32[1]{0}', space=sflag, size = 0x4, scoped, tag = 'scoped memory for tpu_custom_call.1']
    #allocation7 [shape = 'u8[4096]{0}', space=vmem, size = 0x1000, scoped, tag = 'output window, operand 0, single buffered']
    %8 = vsyncpa [#allocation3], 0
    %9 = vsyncpa [#allocation6], 0
    %10 = vsyncpa [#allocation4], 0
    // Predicated region
    $region2: #{tpu_custom_call.1} parent=1 // pred_check
      _
    $region3: #{tpu_custom_call.1} parent=1 // pred_check_branch
      %12 = sbr.rel (0) target = $region5
    $region4: #{tpu_custom_call.1} parent=1 // pred_region
      %14 = vsyncadd [#allocation3], 0
      %s16 = sshll.u32 %s0, 4
      %s17 = int_to_ptr.hbm [resolvable:$true] %s16
      %s18 = sshll.u32 [#allocation2], 4
      %s19 = int_to_ptr.vmem [resolvable:$true] %s18
      %21 = dma.hbm_to_vmem [thread:$0]  %s17, 64, %s19, [#allocation3]
    $region5: #{tpu_custom_call.1} parent=1 // pred_fallthru
      _
    // Predicated region
    $region6: #{tpu_custom_call.1} parent=1 // pred_check
      _
    $region7: #{tpu_custom_call.1} parent=1 // pred_check_branch
      %23 = sbr.rel (0) target = $region9
    $region8: #{tpu_custom_call.1} parent=1 // pred_region
      %25 = vsyncadd [#allocation6], 0
      %s26 = sshll.u32 %s1, 4
      %s27 = int_to_ptr.hbm [resolvable:$true] %s26
      %s28 = sshll.u32 [#allocation5], 4
      %s29 = int_to_ptr.vmem [resolvable:$true] %s28
      %34 = dma.hbm_to_vmem [thread:$0]  %s27, 256, %s29, [#allocation6], 64, 64, 4
    $region9: #{tpu_custom_call.1} parent=1 // pred_fallthru
      _
    // Predicated region
    $region10: #{tpu_custom_call.1} parent=1 // pred_check
      _
    $region11: #{tpu_custom_call.1} parent=1 // pred_check_branch
      %36 = sbr.rel (0) target = $region13
    $region12: #{tpu_custom_call.1} parent=1 // pred_region
      _
    $region13: #{tpu_custom_call.1} parent=1 // pred_fallthru
      _
    // Predicated region
    $region14: #{tpu_custom_call.1} parent=1 // pred_check
      _
    $region15: #{tpu_custom_call.1} parent=1 // pred_check_branch
      %38 = sbr.rel (0) target = $region17
    $region16: #{tpu_custom_call.1} parent=1 // pred_region
      %40 = dma.done [#allocation3], 64
    $region17: #{tpu_custom_call.1} parent=1 // pred_fallthru
      _
    // Predicated region
    $region18: #{tpu_custom_call.1} parent=1 // pred_check
      _
    $region19: #{tpu_custom_call.1} parent=1 // pred_check_branch
      %42 = sbr.rel (0) target = $region21
    $region20: #{tpu_custom_call.1} parent=1 // pred_region
      %44 = dma.done [#allocation6], 256
    $region21: #{tpu_custom_call.1} parent=1 // pred_fallthru
      _
    %v46 = vld [vmem:[#allocation2] sm:$0xf]
    %v47 = vld [vmem:[#allocation5] sm:$0xf]
    %v48 = vld [vmem:[#allocation5 + $0x4] sm:$0xf]
    %v49 = vld [vmem:[#allocation5 + $0x8] sm:$0xf]
    %v50 = vld [vmem:[#allocation5 + $0xc] sm:$0xf]
    %v51 = vld [vmem:[%s2] sm:$0x1]
    %v53 = vperm.slane %v51, 0
    %v59 = vunpack.c.l.b16 %v47
    %v60 = vunpack.c.l.b16 %v48
    %v61 = vunpack.c.l.b16 %v49
    %v62 = vunpack.c.l.b16 %v50
    %v63 = vpack.c.b16 %v60, %v59
    %v64 = vpack.c.b16 %v62, %v61
    %vm67 = vcmask 261120
    %v69 = vsel %vm67, %v46, 0
    %71 = vmatpush.bf16.msra.mxu0 0
    %72 = vmatpush.bf16.msra.mxu0 0
    %73 = vmatpush.bf16.msra.mxu0 0
    %74 = vmatpush.bf16.msra.mxu0 0
    %75 = vmatpush.bf16.msra.mxu0 0
    %76 = vmatpush.bf16.msra.mxu0 0
    %77 = vmatpush.bf16.msra.mxu0 %v64
    %78 = vmatpush.bf16.msra.mxu0 %v63
    %79 = vmatmul.bf16.gmra.mxu0 %v69
    %v80 = vpop.f32.mrf.mxu0
    %v81 = vadd.f32 %v53, %v80
    %v82 = vpop.f32.mrf.mxu0
    %83 = vdwg.mxu0
    %84 = vst [vmem:[#allocation7] sm:$0xff] %v81
    // Predicated region
    $region22: #{tpu_custom_call.1} parent=1 // pred_check
      _
    $region23: #{tpu_custom_call.1} parent=1 // pred_check_branch
      %86 = sbr.rel (0) target = $region25
    $region24: #{tpu_custom_call.1} parent=1 // pred_region
      %88 = vsyncadd [#allocation4], 0
      %s90 = sshll.u32 [#allocation7], 4
      %s91 = int_to_ptr.vmem [resolvable:$true] %s90
      %s92 = sshll.u32 %s3, 4
      %s93 = int_to_ptr.hbm [resolvable:$true] %s92
      %95 = dma.vmem_to_hbm [thread:$0]  %s91, 128, %s93, [#allocation4]
    $region25: #{tpu_custom_call.1} parent=1 // pred_fallthru
      _
    // Predicated region
    $region26: #{tpu_custom_call.1} parent=1 // pred_check
      _
    $region27: #{tpu_custom_call.1} parent=1 // pred_check_branch
      %97 = sbr.rel (0) target = $region29
    $region28: #{tpu_custom_call.1} parent=1 // pred_region
      %99 = dma.done [#allocation4], 128
    $region29: #{tpu_custom_call.1} parent=1 // pred_fallthru
      _
    %100 = vsyncpa [#allocation3], 1
    %101 = vsyncpa [#allocation6], 1
    %102 = vsyncpa [#allocation4], 1

</llo_original>
